<compile_context>
chip_gen: v7x
topology: tpu7x:2x2x1
jax: 0.10.0
libtpu: 0.0.40
codegen_flags: <defaults>
</compile_context>

<pallas_src>
import jax
import jax.numpy as jnp
from jax import lax
from jax.experimental import pallas as pl
from jax.experimental.pallas import tpu as pltpu

EPS = 1e-5                                  # nn.BatchNorm2d default eps
_FUSED_VMEM_BUDGET = 12 * 1024 * 1024       # conservative across v5e/v6e/v7x
_VMEM_LIMIT = 32 * 1024 * 1024


def _round_up(x, m):
    return ((x + m - 1) // m) * m


# --------------- fused path: conv + BN(batch stats) + ReLU, one kernel -------
def _make_fused_kernel(m_valid, m_pad, eps):
    inv_m = 1.0 / float(m_valid)
    pad_cols = int(m_pad - m_valid)

    def kernel(patch_ref, w_ref, b_ref, g_ref, beta_ref, o_ref):
        bias = b_ref[...]                                       # (Cout, 1) f32
        # Conv as one MXU matmul: (Cout, K) @ (K, M_pad), bf16 in / f32 acc.
        acc = jnp.dot(w_ref[...], patch_ref[...],
                      preferred_element_type=jnp.float32)
        acc = acc + bias                                        # (Cout, M_pad)

        # Batch statistics over the valid M columns.  Zero-padded patch columns
        # yield conv == bias exactly, so their contribution is subtracted
        # analytically instead of masked (no iota / compare / extra vmuls).
        s1 = jnp.sum(acc, axis=1, keepdims=True)
        if pad_cols:
            s1 = s1 - float(pad_cols) * bias
        mean = s1 * inv_m

        d = acc - mean                              # centered -> robust variance
        s2 = jnp.sum(d * d, axis=1, keepdims=True)
        if pad_cols:
            db = bias - mean
            s2 = s2 - float(pad_cols) * db * db
        var = s2 * inv_m

        scale = g_ref[...] * lax.rsqrt(var + eps)               # (Cout, 1)
        # (x - mean) * gamma/sigma + beta, then ReLU; lane-dense f32 store.
        o_ref[...] = jnp.maximum(d * scale + beta_ref[...], 0.0)

    return kernel


def _fused_forward(patches_km, w_km, b_col, g_col, beta_col):
    K, M = patches_km.shape
    Cout = w_km.shape[0]
    m_pad = _round_up(M, 128)            # lane-dense (multiple-of-128) output
    if m_pad != M:
        patches_km = jnp.pad(patches_km, ((0, 0), (0, m_pad - M)))

    return pl.pallas_call(
        _make_fused_kernel(M, m_pad, EPS),
        grid_spec=pltpu.PrefetchScalarGridSpec(
            num_scalar_prefetch=0,
            grid=(1,),
            in_specs=[
                pl.BlockSpec((K, m_pad), lambda i: (0, 0)),     # patches (bf16)
                pl.BlockSpec((Cout, K), lambda i: (0, 0)),      # weights (bf16)
                pl.BlockSpec((Cout, 1), lambda i: (0, 0)),      # bias
                pl.BlockSpec((Cout, 1), lambda i: (0, 0)),      # gamma
                pl.BlockSpec((Cout, 1), lambda i: (0, 0)),      # beta
            ],
            out_specs=pl.BlockSpec((Cout, m_pad), lambda i: (0, 0)),
        ),
        out_shape=jax.ShapeDtypeStruct((Cout, m_pad), jnp.float32),
        compiler_params=pltpu.CompilerParams(
            dimension_semantics=("arbitrary",),
            vmem_limit_bytes=_VMEM_LIMIT,
        ),
    )(patches_km, w_km, b_col, g_col, beta_col)


# --------------- fallback path (large M): two pipelined passes ---------------
def _conv_stats_kernel(patch_ref, w_ref, b_ref, conv_ref, sum_ref, sq_ref):
    @pl.when(pl.program_id(1) == 0)
    def _init():
        sum_ref[...] = jnp.zeros_like(sum_ref)
        sq_ref[...] = jnp.zeros_like(sq_ref)

    acc = jnp.dot(w_ref[...], patch_ref[...],
                  preferred_element_type=jnp.float32)
    acc = acc + b_ref[...]
    conv_ref[...] = acc.astype(jnp.bfloat16)    # bf16 intermediate: halves HBM
    # Unmasked sums; padded columns corrected analytically after the call.
    sum_ref[...] += jnp.sum(acc, axis=1, keepdims=True)[None]
    sq_ref[...] += jnp.sum(acc * acc, axis=1, keepdims=True)[None]


def _bn_relu_kernel(conv_ref, scale_ref, shift_ref, o_ref):
    y = conv_ref[...].astype(jnp.float32) * scale_ref[...] + shift_ref[...]
    o_ref[...] = jnp.maximum(y, 0.0)


def _two_pass_forward(patches_km, w_km, b_col, g_col, beta_col, *, tm=2048):
    K, M = patches_km.shape
    Cout = w_km.shape[0]
    # Even tile count so a leading size-2 "parallel" grid axis can split the
    # conv+stats pass across v7x's two TensorCores (harmless on v5e/v6e).
    m_pad = _round_up(M, 2 * tm)
    if m_pad != M:
        patches_km = jnp.pad(patches_km, ((0, 0), (0, m_pad - M)))
    n_tiles = m_pad // tm
    tiles_per_core = n_tiles // 2

    conv_bf16, sums, sqs = pl.pallas_call(
        _conv_stats_kernel,
        grid_spec=pltpu.PrefetchScalarGridSpec(
            num_scalar_prefetch=0,
            grid=(2, tiles_per_core),
            in_specs=[
                # TODO(synk): add pipeline_mode=pl.Buffered(3) here if profiles
                # still show exposed DMA waits on the patch stream.
                pl.BlockSpec((K, tm),
                             lambda c, i: (0, c * tiles_per_core + i)),
                pl.BlockSpec((Cout, K), lambda c, i: (0, 0)),   # resident
                pl.BlockSpec((Cout, 1), lambda c, i: (0, 0)),   # resident
            ],
            out_specs=[
                pl.BlockSpec((Cout, tm),
                             lambda c, i: (0, c * tiles_per_core + i)),
                pl.BlockSpec((1, Cout, 1), lambda c, i: (c, 0, 0)),  # per-core
                pl.BlockSpec((1, Cout, 1), lambda c, i: (c, 0, 0)),  # partials
            ],
        ),
        out_shape=[
            jax.ShapeDtypeStruct((Cout, m_pad), jnp.bfloat16),
            jax.ShapeDtypeStruct((2, Cout, 1), jnp.float32),
            jax.ShapeDtypeStruct((2, Cout, 1), jnp.float32),
        ],
        compiler_params=pltpu.CompilerParams(
            dimension_semantics=("parallel", "arbitrary"),
            vmem_limit_bytes=_VMEM_LIMIT,
        ),
    )(patches_km, w_km, b_col)

    # Tiny O(Cout) math: reduce per-core partials, correct for padded columns
    # (each contributes exactly bias / bias^2), then build affine scale/shift.
    pad_cols = float(m_pad - M)
    s1 = jnp.sum(sums, axis=0) - pad_cols * b_col
    s2 = jnp.sum(sqs, axis=0) - pad_cols * b_col * b_col
    mean = s1 / float(M)
    var = s2 / float(M) - mean * mean               # biased (training-mode) var
    scale = g_col * lax.rsqrt(var + EPS)
    shift = beta_col - mean * scale

    out_flat = pl.pallas_call(
        _bn_relu_kernel,
        grid_spec=pltpu.PrefetchScalarGridSpec(
            num_scalar_prefetch=0,
            grid=(n_tiles,),
            in_specs=[
                pl.BlockSpec((Cout, tm), lambda i: (0, i)),
                pl.BlockSpec((Cout, 1), lambda i: (0, 0)),
                pl.BlockSpec((Cout, 1), lambda i: (0, 0)),
            ],
            out_specs=pl.BlockSpec((Cout, tm), lambda i: (0, i)),
        ),
        out_shape=jax.ShapeDtypeStruct((Cout, m_pad), jnp.float32),
        compiler_params=pltpu.CompilerParams(
            dimension_semantics=("parallel",),
            vmem_limit_bytes=_VMEM_LIMIT,
        ),
    )(conv_bf16, scale, shift)
    return out_flat


# ------------------------------ module wrapper --------------------------------
def sub_network_forward(x_nchw, w, b, gamma, beta, *, stride=2, padding=1):
    """Fused Conv2d + BatchNorm2d(train) + ReLU. Input/output are NCHW f32."""
    N, Cin, H, W = x_nchw.shape
    Cout, _, KH, KW = w.shape
    Hout = (H + 2 * padding - KH) // stride + 1
    Wout = (W + 2 * padding - KW) // stride + 1
    M = N * Hout * Wout
    K = KH * KW * Cin

    # --- glue: build im2col patches DIRECTLY in (K, M) layout, in bf16. ------
    # The channel-first transpose runs on the 1x-sized input; the 9x-expanded
    # tap array is created already in its final (K, M) layout (no `.T`, no
    # separate cast pass over the dominant stream).
    x_cf = jnp.transpose(x_nchw, (1, 0, 2, 3)).astype(jnp.bfloat16)  # (Cin,N,H,W)
    x_cf = jnp.pad(x_cf, ((0, 0), (0, 0),
                          (padding, padding), (padding, padding)))
    taps = []
    for kh in range(KH):
        for kw in range(KW):
            taps.append(x_cf[:, :,
                             kh:kh + stride * Hout:stride,
                             kw:kw + stride * Wout:stride])
    patches_km = jnp.stack(taps, axis=0).reshape(K, M)  # K order = (kh, kw, cin)

    # PyTorch OIHW weights -> (Cout, K) with matching (kh, kw, cin) ordering.
    w_km = jnp.transpose(w, (0, 2, 3, 1)).reshape(Cout, K).astype(jnp.bfloat16)
    b_col = b.reshape(Cout, 1).astype(jnp.float32)
    g_col = gamma.reshape(Cout, 1).astype(jnp.float32)
    beta_col = beta.reshape(Cout, 1).astype(jnp.float32)

    # Path choice: one fused kernel when double-buffered input/output plus f32
    # temporaries fit well inside scoped VMEM on every generation; otherwise a
    # two-pass tiled pipeline (conv+stats, then normalize+ReLU).
    m128 = _round_up(M, 128)
    fused_vmem = m128 * (2 * K * 2 + 2 * Cout * 4 + 4 * Cout * 4)
    if fused_vmem <= _FUSED_VMEM_BUDGET:
        out_flat = _fused_forward(patches_km, w_km, b_col, g_col, beta_col)
    else:
        out_flat = _two_pass_forward(patches_km, w_km, b_col, g_col, beta_col)

    # NCHW module contract: the slice+reshape+transpose fuses into one copy
    # under jit.  TODO(synk): return (Cout, N, Hout, Wout) / NHWC directly if
    # the downstream consumer accepts it (saves one HBM pass, mostly on v5e).
    out = out_flat[:, :M].reshape(Cout, N, Hout, Wout)
    return jnp.transpose(out, (1, 0, 2, 3))


def reference_forward(x, w, b, gamma, beta, *, stride=2, padding=1):
    """Pure-JAX f32 reference mirroring the PyTorch module in training mode."""
    y = lax.conv_general_dilated(
        x, w, window_strides=(stride, stride),
        padding=[(padding, padding), (padding, padding)],
        dimension_numbers=("NCHW", "OIHW", "NCHW"))
    y = y + b.reshape(1, -1, 1, 1)
    mean = jnp.mean(y, axis=(0, 2, 3), keepdims=True)
    var = jnp.mean((y - mean) ** 2, axis=(0, 2, 3), keepdims=True)
    y = (y - mean) / jnp.sqrt(var + EPS) * gamma.reshape(1, -1, 1, 1) \
        + beta.reshape(1, -1, 1, 1)
    return jnp.maximum(y, 0.0)


if __name__ == "__main__":
    key = jax.random.PRNGKey(0)
    k_x, k_w, k_b = jax.random.split(key, 3)

    # Small shapes consistent with the module: N=2, input_ch=4, output_ch=8, 16x16.
    N, Cin, Cout, H, W = 2, 4, 8, 16, 16

    x = jax.random.normal(k_x, (N, Cin, H, W), dtype=jnp.float32)
    w = jax.random.normal(k_w, (Cout, Cin, 3, 3), dtype=jnp.float32) * 0.1
    b = jax.random.normal(k_b, (Cout,), dtype=jnp.float32) * 0.1
    gamma = jnp.ones((Cout,), dtype=jnp.float32)   # nn.BatchNorm2d default init
    beta = jnp.zeros((Cout,), dtype=jnp.float32)

    fwd = jax.jit(sub_network_forward)             # im2col glue fuses under jit
    out = jax.block_until_ready(fwd(x, w, b, gamma, beta))

    ref = reference_forward(x, w, b, gamma, beta)
    assert out.shape == (N, Cout, 8, 8), out.shape
    # bf16 MXU inputs (f32 accumulation / BN epilogue) -> slightly looser tol.
    assert jnp.allclose(out, ref, atol=3e-2, rtol=3e-2), (
        "mismatch vs reference: max|diff|="
        f"{float(jnp.max(jnp.abs(out - ref)))}")

    print("KERNEL_OK")
</pallas_src>

<mosaic_0001>
module attributes {stable_mosaic.version = 11 : i64} {
  func.func @kernel(%arg0: i32, %arg1: memref<36x128xbf16, #tpu.memory_space<vmem>>, %arg2: memref<8x36xbf16, #tpu.memory_space<vmem>>, %arg3: memref<8x1xf32, #tpu.memory_space<vmem>>, %arg4: memref<8x1xf32, #tpu.memory_space<vmem>>, %arg5: memref<8x1xf32, #tpu.memory_space<vmem>>, %arg6: memref<8x128xf32, #tpu.memory_space<vmem>>) attributes {dimension_semantics = [#tpu.dimension_semantics<arbitrary>], iteration_bounds = array<i64: 1>, scalar_prefetch = 0 : i64, scratch_operands = 0 : i64, tpu.core_type = #tpu.core_type<tc>, window_params = [{pipeline_mode = #tpu.pipeline_mode<synchronous>, transform_indices = @transform_0, window_bounds = array<i64: 36, 128>}, {pipeline_mode = #tpu.pipeline_mode<synchronous>, transform_indices = @transform_1, window_bounds = array<i64: 8, 36>}, {pipeline_mode = #tpu.pipeline_mode<synchronous>, transform_indices = @transform_2, window_bounds = array<i64: 8, 1>}, {pipeline_mode = #tpu.pipeline_mode<synchronous>, transform_indices = @transform_3, window_bounds = array<i64: 8, 1>}, {pipeline_mode = #tpu.pipeline_mode<synchronous>, transform_indices = @transform_4, window_bounds = array<i64: 8, 1>}, {pipeline_mode = #tpu.pipeline_mode<synchronous>, transform_indices = @transform_5, window_bounds = array<i64: 8, 128>}]} {
    %c0 = arith.constant 0 : index
    %c0_0 = arith.constant 0 : index
    %0 = vector.load %arg3[%c0, %c0_0] : memref<8x1xf32, #tpu.memory_space<vmem>>, vector<8x1xf32>
    %c0_1 = arith.constant 0 : index
    %c0_2 = arith.constant 0 : index
    %1 = vector.load %arg2[%c0_1, %c0_2] : memref<8x36xbf16, #tpu.memory_space<vmem>>, vector<8x36xbf16>
    %c0_3 = arith.constant 0 : index
    %c0_4 = arith.constant 0 : index
    %2 = vector.load %arg1[%c0_3, %c0_4] : memref<36x128xbf16, #tpu.memory_space<vmem>>, vector<36x128xbf16>
    %cst = arith.constant dense<0.000000e+00> : vector<8x128xf32>
    %3 = tpu.matmul %1, %2, %cst {dimension_numbers = #tpu.dot_dimension_numbers<[1], [0], [0], [1], [0, 0, 1, 1], [], []>} : vector<8x36xbf16>, vector<36x128xbf16>, vector<8x128xf32> -> vector<8x128xf32>
    %4 = vector.broadcast %0 : vector<8x1xf32> to vector<8x128xf32>
    %5 = arith.addf %3, %4 : vector<8x128xf32>
    %cst_5 = arith.constant dense<0.000000e+00> : vector<8xf32>
    %6 = vector.multi_reduction <add>, %5, %cst_5 [1] : vector<8x128xf32> to vector<8xf32>
    %7 = vector.shape_cast %6 : vector<8xf32> to vector<8x1xf32>
    %cst_6 = arith.constant 7.812500e-03 : f32
    %8 = vector.broadcast %cst_6 : f32 to vector<8x1xf32>
    %9 = arith.mulf %7, %8 : vector<8x1xf32>
    %10 = vector.broadcast %9 : vector<8x1xf32> to vector<8x128xf32>
    %11 = arith.subf %5, %10 : vector<8x128xf32>
    %12 = arith.mulf %11, %11 : vector<8x128xf32>
    %cst_7 = arith.constant dense<0.000000e+00> : vector<8xf32>
    %13 = vector.multi_reduction <add>, %12, %cst_7 [1] : vector<8x128xf32> to vector<8xf32>
    %14 = vector.shape_cast %13 : vector<8xf32> to vector<8x1xf32>
    %cst_8 = arith.constant 7.812500e-03 : f32
    %15 = vector.broadcast %cst_8 : f32 to vector<8x1xf32>
    %16 = arith.mulf %14, %15 : vector<8x1xf32>
    %c0_9 = arith.constant 0 : index
    %c0_10 = arith.constant 0 : index
    %17 = vector.load %arg4[%c0_9, %c0_10] : memref<8x1xf32, #tpu.memory_space<vmem>>, vector<8x1xf32>
    %cst_11 = arith.constant 9.99999974E-6 : f32
    %18 = vector.broadcast %cst_11 : f32 to vector<8x1xf32>
    %19 = arith.addf %16, %18 : vector<8x1xf32>
    %20 = math.rsqrt %19 : vector<8x1xf32>
    %21 = arith.mulf %17, %20 : vector<8x1xf32>
    %22 = vector.broadcast %21 : vector<8x1xf32> to vector<8x128xf32>
    %23 = arith.mulf %11, %22 : vector<8x128xf32>
    %c0_12 = arith.constant 0 : index
    %c0_13 = arith.constant 0 : index
    %24 = vector.load %arg5[%c0_12, %c0_13] : memref<8x1xf32, #tpu.memory_space<vmem>>, vector<8x1xf32>
    %25 = vector.broadcast %24 : vector<8x1xf32> to vector<8x128xf32>
    %26 = arith.addf %23, %25 : vector<8x128xf32>
    %cst_14 = arith.constant 0.000000e+00 : f32
    %27 = vector.broadcast %cst_14 : f32 to vector<8x128xf32>
    %28 = arith.maximumf %26, %27 : vector<8x128xf32>
    %c0_15 = arith.constant 0 : index
    %c0_16 = arith.constant 0 : index
    %29 = vector.load %arg6[%c0_15, %c0_16] : memref<8x128xf32, #tpu.memory_space<vmem>>, vector<8x128xf32>
    tpu.vector_store %arg6[%c0_15, %c0_16], %28 {strides = array<i32>} : memref<8x128xf32, #tpu.memory_space<vmem>>, vector<8x128xf32>,
    return
  }
  func.func @transform_0(%arg0: i32) -> (i32, i32) {
    %c0_i32 = arith.constant 0 : i32
    %c0_i32_0 = arith.constant 0 : i32
    %c0_i32_1 = arith.constant 0 : i32
    return %c0_i32, %c0_i32_0 : i32, i32
  }
  func.func @transform_1(%arg0: i32) -> (i32, i32) {
    %c0_i32 = arith.constant 0 : i32
    %c0_i32_0 = arith.constant 0 : i32
    %c0_i32_1 = arith.constant 0 : i32
    return %c0_i32, %c0_i32_0 : i32, i32
  }
  func.func @transform_2(%arg0: i32) -> (i32, i32) {
    %c0_i32 = arith.constant 0 : i32
    %c0_i32_0 = arith.constant 0 : i32
    %c0_i32_1 = arith.constant 0 : i32
    return %c0_i32, %c0_i32_0 : i32, i32
  }
  func.func @transform_3(%arg0: i32) -> (i32, i32) {
    %c0_i32 = arith.constant 0 : i32
    %c0_i32_0 = arith.constant 0 : i32
    %c0_i32_1 = arith.constant 0 : i32
    return %c0_i32, %c0_i32_0 : i32, i32
  }
  func.func @transform_4(%arg0: i32) -> (i32, i32) {
    %c0_i32 = arith.constant 0 : i32
    %c0_i32_0 = arith.constant 0 : i32
    %c0_i32_1 = arith.constant 0 : i32
    return %c0_i32, %c0_i32_0 : i32, i32
  }
  func.func @transform_5(%arg0: i32) -> (i32, i32) {
    %c0_i32 = arith.constant 0 : i32
    %c0_i32_0 = arith.constant 0 : i32
    %c0_i32_1 = arith.constant 0 : i32
    return %c0_i32, %c0_i32_0 : i32, i32
  }
}

</mosaic_0001>

<llo_original>
// kernel: sub_network_forward.1
$region0: #{sub_network_forward.1}
  #allocation0 [shape = 'u32[]', space=smem, size = 0x4, offset = 0x4, fixed_abs, tag = 'smem constant byte address 0x4 - core index']
  #allocation1 [shape = 'u32[144,128]{1,0:T(1,128)}', space=vmem, size = 0x12000, scoped, tag = 'internal scratch']
  %s0 = inlined_call_operand.vmem [shape: bf16[36,128], index: 0, kind: input, shape index: {}]
  %s1 = inlined_call_operand.vmem [shape: bf16[8,36], index: 1, kind: input, shape index: {}]
  %s2 = inlined_call_operand.vmem [shape: f32[8,1], index: 2, kind: input, shape index: {}]
  %s3 = inlined_call_operand.vmem [shape: f32[8,1], index: 3, kind: input, shape index: {}]
  %s4 = inlined_call_operand.vmem [shape: f32[8,1], index: 4, kind: input, shape index: {}]
  %s5 = inlined_call_operand.vmem [shape: f32[8,128], index: 5, kind: output, shape index: {}]
  %s6 = sld [smem:[#allocation0]]
  $region30: #{sub_network_forward.1} parent=0
    _
  %s8 = ssub.s32 1, %s6
  %s9 = scalar_select 0, %s8, %s6
  // Predicated region
  $region2: #{sub_network_forward.1} parent=0 // pred_check
    _
  $region3: #{sub_network_forward.1} parent=0 // pred_check_branch
    %11 = sbr.rel (0) target = $region5
  $region4: #{sub_network_forward.1} parent=0 // pred_region
    _
  $region5: #{sub_network_forward.1} parent=0 // pred_fallthru
    _
  // Predicated region
  $region6: #{sub_network_forward.1} parent=0 // pred_check
    _
  $region7: #{sub_network_forward.1} parent=0 // pred_check_branch
    %13 = sbr.rel (0) target = $region9
  $region8: #{sub_network_forward.1} parent=0 // pred_region
    _
  $region9: #{sub_network_forward.1} parent=0 // pred_fallthru
    _
  // Predicated region
  $region10: #{sub_network_forward.1} parent=0 // pred_check
    _
  $region11: #{sub_network_forward.1} parent=0 // pred_check_branch
    %15 = sbr.rel (0) target = $region13
  $region12: #{sub_network_forward.1} parent=0 // pred_region
    _
  $region13: #{sub_network_forward.1} parent=0 // pred_fallthru
    _
  // Predicated region
  $region14: #{sub_network_forward.1} parent=0 // pred_check
    _
  $region15: #{sub_network_forward.1} parent=0 // pred_check_branch
    %17 = sbr.rel (0) target = $region17
  $region16: #{sub_network_forward.1} parent=0 // pred_region
    _
  $region17: #{sub_network_forward.1} parent=0 // pred_fallthru
    _
  // Predicated region
  $region18: #{sub_network_forward.1} parent=0 // pred_check
    _
  $region19: #{sub_network_forward.1} parent=0 // pred_check_branch
    %19 = sbr.rel (0) target = $region21
  $region20: #{sub_network_forward.1} parent=0 // pred_region
    _
  $region21: #{sub_network_forward.1} parent=0 // pred_fallthru
    _
  %v21 = vld [vmem:[%s2] sm:$0xff]
  %v22 = vld [vmem:[%s1] sm:$0xf]
  %v23 = vld [vmem:[%s0] sm:$0xf]
  %v24 = vld [vmem:[%s0 + $0x4] sm:$0xf]
  %v25 = vld [vmem:[%s0 + $0x8] sm:$0xf]
  %v26 = vld [vmem:[%s0 + $0xc] sm:$0xf]
  %v27 = vld [vmem:[%s0 + $0x10] sm:$0x3]
  %29 = vset.pattern.permute.xlu0 0
  %30 = vperm.xlu0 %29, %v21
  %v31 = vpop.permute.xlu0 %30
  %v38 = vunpack.c.l.b16 %v23
  %v39 = vunpack.c.l.b16 %v24
  %v40 = vunpack.c.l.b16 %v25
  %v41 = vunpack.c.l.b16 %v26
  %v42 = vunpack.c.l.b16 %v27
  %v43 = vpack.c.b16 %v39, %v38
  %v44 = vpack.c.b16 %v41, %v40
  %v45 = vpack.c.b16 %v42, %v42
  %vm48 = vcmask 293888
  %v50 = vsel %vm48, %v22, 0
  %vm52 = vcmask 1041408
  %v54 = vsel %vm52, %v45, 0
  %56 = vmatprep.subr.bf16.mxu0 0
  %57 = vmatpush1.bf16.msra.mxu0 %v43
  %58 = vmatprep.subr.bf16.mxu0 0
  %59 = vmatpush1.bf16.msra.mxu0 %v44
  %60 = vmatprep.subr.bf16.mxu0 0
  %61 = vmatpush1.bf16.msra.mxu0 %v54
  %62 = vmatprep.subr.bf16.mxu0 0
  %63 = vmatpush1.bf16.msra.mxu0 0
  %64 = vmatprep.subr.bf16.mxu0 0
  %65 = vmatpush1.bf16.msra.mxu0 0
  %66 = vmatprep.subr.bf16.mxu0 0
  %67 = vmatpush1.bf16.msra.mxu0 0
  %68 = vmatprep.subr.bf16.mxu0 0
  %69 = vmatpush1.bf16.msra.mxu0 0
  %70 = vmatprep.subr.bf16.mxu0 0
  %71 = vmatpush1.bf16.msra.mxu0 0
  %72 = vmatprep.subr.bf16.mxu0 0
  %73 = vmatpush1.bf16.msra.mxu0 0
  %74 = vmatprep.subr.bf16.mxu0 0
  %75 = vmatpush1.bf16.msra.mxu0 0
  %76 = vmatprep.subr.bf16.mxu0 0
  %77 = vmatpush1.bf16.msra.mxu0 0
  %78 = vmatprep.subr.bf16.mxu0 0
  %79 = vmatpush1.bf16.msra.mxu0 0
  %80 = vmatprep.subr.bf16.mxu0 0
  %81 = vmatpush1.bf16.msra.mxu0 0
  %82 = vmatprep.subr.bf16.mxu0 0
  %83 = vmatpush1.bf16.msra.mxu0 0
  %84 = vmatprep.subr.bf16.mxu0 0
  %85 = vmatpush1.bf16.msra.mxu0 0
  %86 = vmatprep.subr.bf16.mxu0 0
  %87 = vmatpush1.bf16.msra.mxu0 0
  %88 = vmatprep.mubr.bf16.mxu0 0
  %89 = vmatmul.mubr.bf16.gmra.mrb[0].mxu0 %v50
  %v90 = vpop.f32.mrb[0].mxu0
  %v91 = vadd.f32 %v31, %v90
  %v92 = vpop.f32.mrb[0].mxu0
  %v93 = vpop.f32.mrb[0].mxu0
  %v94 = vpop.f32.mrb[0].mxu0
  %95 = vdwg.mxu0
  %96 = vadd.xlane.f32.xlu0 %v91
  %v97 = vpop.xlane.xlu0 %96
  %v98 = vmul.f32 %v97, 0.0078125
  %v99 = vsub.f32 %v91, %v98
  %v100 = vmul.f32 %v99, %v99
  %101 = vadd.xlane.f32.xlu0 %v100
  %v102 = vpop.xlane.xlu0 %101
  %v103 = vmul.f32 %v102, 0.0078125
  %v104 = vld [vmem:[%s3] sm:$0xff]
  %v105 = vadd.f32 %v103, 1e-05
  %v106 = vrsqrt.pop %v105
  %v107 = vmul.f32 %v104, %v106
  %109 = vset.pattern.permute.xlu0 0
  %110 = vperm.xlu0 %109, %v107
  %v111 = vpop.permute.xlu0 %110
  %v113 = vmul.f32 %v99, %v111
  %v114 = vld [vmem:[%s4] sm:$0xff]
  %116 = vset.pattern.permute.xlu0 0
  %117 = vperm.xlu0 %116, %v114
  %v118 = vpop.permute.xlu0 %117
  %v120 = vadd.f32 %v113, %v118
  %v121 = vmax.f32 %v120, 0.0
  %122 = vst [vmem:[%s5] sm:$0xff] %v121
  // Predicated region
  $region22: #{sub_network_forward.1} parent=0 // pred_check
    _
  $region23: #{sub_network_forward.1} parent=0 // pred_check_branch
    %124 = sbr.rel (0) target = $region25
  $region24: #{sub_network_forward.1} parent=0 // pred_region
    _
  $region25: #{sub_network_forward.1} parent=0 // pred_fallthru
    _
  // Predicated region
  $region26: #{sub_network_forward.1} parent=0 // pred_check
    _
  $region27: #{sub_network_forward.1} parent=0 // pred_check_branch
    %126 = sbr.rel (0) target = $region29
  $region28: #{sub_network_forward.1} parent=0 // pred_region
    _
  $region29: #{sub_network_forward.1} parent=0 // pred_fallthru
    _

</llo_original>
